<compile_context>
chip_gen: v7x
topology: tpu7x:2x2x1
jax: 0.10.0
libtpu: 0.0.40
codegen_flags: <defaults>
</compile_context>

<pallas_src>
import jax
import jax.numpy as jnp
from jax.experimental import pallas as pl
from jax.experimental.pallas import tpu as pltpu


def _round_up(x, m):
    return ((x + m - 1) // m) * m


# ---------------------------------------------------------------------------
# Phase 1: H = (X @ W) * dinv   (transformed features, pre-scaled by src dinv)
# ---------------------------------------------------------------------------
def transform_kernel(x_ref, w_ref, dinv_ref, h_ref):
    h = jnp.dot(x_ref[...], w_ref[...], preferred_element_type=jnp.float32)
    h_ref[...] = (h * dinv_ref[...]).astype(h_ref.dtype)


# ---------------------------------------------------------------------------
# Phase 2: out = dinv * (A @ H) + b   (tiled over dst rows i, src cols k)
# ---------------------------------------------------------------------------
def aggregate_kernel(a_ref, h_ref, dinv_ref, b_ref, o_ref, acc_ref):
    k = pl.program_id(1)

    @pl.when(k == 0)
    def _():
        acc_ref[...] = jnp.zeros_like(acc_ref)

    # A tile arrives as bf16 (exact small-integer counts); accumulate in f32.
    acc_ref[...] += jnp.dot(a_ref[...].astype(jnp.float32), h_ref[...],
                            preferred_element_type=jnp.float32)

    @pl.when(k == pl.num_programs(1) - 1)
    def _():
        o_ref[...] = (acc_ref[...] * dinv_ref[...] + b_ref[...]).astype(o_ref.dtype)


def pyg_gcn_forward(edge_index, features, weight, bias):
    """Equivalent of PyG_GCN.forward(graph, features): GCNConv(features, edge_index).

    weight: [F_in, F_out] (transposed from torch's [out, in]); bias: [F_out] or [1, F_out].
    """
    n, f_in = features.shape
    f_out = weight.shape[1]
    src, dst = edge_index[0], edge_index[1]

    # --- tiling / padding: tiles must divide the padded node extent exactly ---
    blk = 512
    if n <= blk:
        n_pad = _round_up(n, 128)
    else:
        n_pad = _round_up(n, blk)
    tm = min(blk, n_pad)       # dst-row tile (phase 2)
    tk = min(blk, n_pad)       # src reduction tile (phase 2)
    tm_h = min(blk, n_pad)     # row tile (phase 1)
    f_out_pad = _round_up(f_out, 128)

    # Dense adjacency with unit weights (duplicate edges accumulate) + self-loops,
    # at padded size.  Entries are small non-negative integers -> bf16 is exact.
    # TODO(synk): edge_index -> dense A scatter has no clean Pallas equivalent; kept in JAX glue.
    a = jnp.zeros((n_pad, n_pad), jnp.float32).at[dst, src].add(1.0)
    a = a.at[jnp.arange(n), jnp.arange(n)].add(1.0)
    a = a.astype(jnp.bfloat16)

    # deg / dinv precomputed in O(E) glue (self-loop contributes +1); padded rows -> 0.
    deg = jnp.zeros((n_pad,), jnp.float32).at[dst].add(1.0)
    deg = deg.at[jnp.arange(n)].add(1.0)
    dinv = jnp.where(deg > 0.0, jax.lax.rsqrt(deg), 0.0).reshape(n_pad, 1)

    x_pad = jnp.zeros((n_pad, f_in), jnp.float32).at[:n, :].set(features)
    w_pad = jnp.zeros((f_in, f_out_pad), jnp.float32).at[:, :f_out].set(weight)
    b_pad = jnp.zeros((1, f_out_pad), jnp.float32).at[:, :f_out].set(
        jnp.reshape(bias, (1, f_out)))

    # ---------------- phase 1: H = (X @ W) * dinv ----------------
    h = pl.pallas_call(
        transform_kernel,
        out_shape=jax.ShapeDtypeStruct((n_pad, f_out_pad), jnp.float32),
        grid=(n_pad // tm_h,),
        in_specs=[
            pl.BlockSpec((tm_h, f_in), lambda i: (i, 0)),
            pl.BlockSpec((f_in, f_out_pad), lambda i: (0, 0)),
            pl.BlockSpec((tm_h, 1), lambda i: (i, 0)),
        ],
        out_specs=pl.BlockSpec((tm_h, f_out_pad), lambda i: (i, 0)),
        compiler_params=pltpu.CompilerParams(dimension_semantics=("parallel",)),
    )(x_pad, w_pad, dinv)

    # ---------------- phase 2: out = dinv * (A @ H) + b ----------------
    out_pad = pl.pallas_call(
        aggregate_kernel,
        out_shape=jax.ShapeDtypeStruct((n_pad, f_out_pad), jnp.float32),
        grid=(n_pad // tm, n_pad // tk),
        in_specs=[
            pl.BlockSpec((tm, tk), lambda i, k: (i, k)),          # A[dst, src] tile
            pl.BlockSpec((tk, f_out_pad), lambda i, k: (k, 0)),   # H src tile
            pl.BlockSpec((tm, 1), lambda i, k: (i, 0)),           # dinv for dst rows
            pl.BlockSpec((1, f_out_pad), lambda i, k: (0, 0)),    # bias
        ],
        out_specs=pl.BlockSpec((tm, f_out_pad), lambda i, k: (i, 0)),
        scratch_shapes=[pltpu.VMEM((tm, f_out_pad), jnp.float32)],
        compiler_params=pltpu.CompilerParams(
            dimension_semantics=("parallel", "arbitrary")),
    )(a, h, dinv, b_pad)

    return out_pad[:n, :f_out]


def reference(edge_index, features, weight, bias):
    n = features.shape[0]
    src, dst = edge_index[0], edge_index[1]
    a = jnp.zeros((n, n), jnp.float32).at[dst, src].add(1.0) + jnp.eye(n, dtype=jnp.float32)
    deg = a.sum(axis=1)
    dinv = jnp.where(deg > 0, 1.0 / jnp.sqrt(deg), 0.0)
    a_norm = dinv[:, None] * a * dinv[None, :]
    return a_norm @ (features @ weight) + jnp.reshape(bias, (1, -1))


if __name__ == "__main__":
    key = jax.random.PRNGKey(0)
    k_src, k_dst, k_x, k_w, k_b = jax.random.split(key, 5)

    N, E, F_IN, F_OUT = 16, 40, 8, 32

    # graph.edges() -> edge_index [2, E] (row 0 = src, row 1 = dst).
    src = jax.random.randint(k_src, (E,), 0, N)
    dst = jax.random.randint(k_dst, (E,), 0, N)
    edge_index = jnp.stack([src, dst], axis=0)

    features = jax.random.normal(k_x, (N, F_IN), jnp.float32)

    limit = (6.0 / (F_IN + F_OUT)) ** 0.5
    weight = jax.random.uniform(k_w, (F_IN, F_OUT), jnp.float32, -limit, limit)
    bias = 0.1 * jax.random.normal(k_b, (1, F_OUT), jnp.float32)

    out = jax.block_until_ready(pyg_gcn_forward(edge_index, features, weight, bias))
    ref = reference(edge_index, features, weight, bias)

    assert out.shape == (N, F_OUT)
    assert jnp.allclose(out, ref, atol=1e-4, rtol=1e-4), "Pallas GCN mismatch vs reference"
    print("KERNEL_OK")
</pallas_src>

<mosaic_0001>
module attributes {stable_mosaic.version = 11 : i64} {
  func.func @transform_kernel(%arg0: i32, %arg1: memref<128x8xf32, #tpu.memory_space<vmem>>, %arg2: memref<8x128xf32, #tpu.memory_space<vmem>>, %arg3: memref<128x1xf32, #tpu.memory_space<vmem>>, %arg4: memref<128x128xf32, #tpu.memory_space<vmem>>) attributes {dimension_semantics = [#tpu.dimension_semantics<parallel>], iteration_bounds = array<i64: 1>, scalar_prefetch = 0 : i64, scratch_operands = 0 : i64, tpu.core_type = #tpu.core_type<tc>, window_params = [{transform_indices = @transform_0, window_bounds = array<i64: 128, 8>}, {pipeline_mode = #tpu.pipeline_mode<synchronous>, transform_indices = @transform_1, window_bounds = array<i64: 8, 128>}, {transform_indices = @transform_2, window_bounds = array<i64: 128, 1>}, {transform_indices = @transform_3, window_bounds = array<i64: 128, 128>}]} {
    %c0 = arith.constant 0 : index
    %c0_0 = arith.constant 0 : index
    %0 = vector.load %arg1[%c0, %c0_0] : memref<128x8xf32, #tpu.memory_space<vmem>>, vector<128x8xf32>
    %c0_1 = arith.constant 0 : index
    %c0_2 = arith.constant 0 : index
    %1 = vector.load %arg2[%c0_1, %c0_2] : memref<8x128xf32, #tpu.memory_space<vmem>>, vector<8x128xf32>
    %cst = arith.constant dense<0.000000e+00> : vector<128x128xf32>
    %2 = tpu.matmul %0, %1, %cst {dimension_numbers = #tpu.dot_dimension_numbers<[1], [0], [0], [1], [0, 0, 1, 1], [], []>} : vector<128x8xf32>, vector<8x128xf32>, vector<128x128xf32> -> vector<128x128xf32>
    %c0_3 = arith.constant 0 : index
    %c0_4 = arith.constant 0 : index
    %3 = vector.load %arg3[%c0_3, %c0_4] : memref<128x1xf32, #tpu.memory_space<vmem>>, vector<128x1xf32>
    %4 = vector.broadcast %3 : vector<128x1xf32> to vector<128x128xf32>
    %5 = arith.mulf %2, %4 : vector<128x128xf32>
    %c0_5 = arith.constant 0 : index
    %c0_6 = arith.constant 0 : index
    %6 = vector.load %arg4[%c0_5, %c0_6] : memref<128x128xf32, #tpu.memory_space<vmem>>, vector<128x128xf32>
    tpu.vector_store %arg4[%c0_5, %c0_6], %5 {strides = array<i32>} : memref<128x128xf32, #tpu.memory_space<vmem>>, vector<128x128xf32>,
    return
  }
  func.func @transform_0(%arg0: i32) -> (i32, i32) {
    %c0_i32 = arith.constant 0 : i32
    %c0_i32_0 = arith.constant 0 : i32
    return %arg0, %c0_i32 : i32, i32
  }
  func.func @transform_1(%arg0: i32) -> (i32, i32) {
    %c0_i32 = arith.constant 0 : i32
    %c0_i32_0 = arith.constant 0 : i32
    %c0_i32_1 = arith.constant 0 : i32
    return %c0_i32, %c0_i32_0 : i32, i32
  }
  func.func @transform_2(%arg0: i32) -> (i32, i32) {
    %c0_i32 = arith.constant 0 : i32
    %c0_i32_0 = arith.constant 0 : i32
    return %arg0, %c0_i32 : i32, i32
  }
  func.func @transform_3(%arg0: i32) -> (i32, i32) {
    %c0_i32 = arith.constant 0 : i32
    %c0_i32_0 = arith.constant 0 : i32
    return %arg0, %c0_i32 : i32, i32
  }
}

</mosaic_0001>

<llo_original>
// kernel: tpu_custom_call.1
$region0: #{tpu_custom_call.1}
  #allocation0 [shape = 'u32[]', space=smem, size = 0x4, offset = 0x4, fixed_abs, tag = 'smem constant byte address 0x4 - core index']
  #allocation1 [shape = 'u32[144,128]{1,0:T(1,128)}', space=vmem, size = 0x12000, scoped, tag = 'internal scratch']
  %s0 = inlined_call_operand.vmem [shape: f32[128,8], index: 0, kind: input, shape index: {}]
  %s1 = inlined_call_operand.vmem [shape: f32[8,128], index: 1, kind: input, shape index: {}]
  %s2 = inlined_call_operand.vmem [shape: f32[128,1], index: 2, kind: input, shape index: {}]
  %s3 = inlined_call_operand.hbm [shape: f32[128,128], index: 3, kind: output, shape index: {}]
  %s4 = sld [smem:[#allocation0]]
  $region22: #{tpu_custom_call.1} parent=0
    _
  %s6 = ssub.s32 1, %s4
  %s7 = scalar_select 0, %s6, %s4
  $region1: #{tpu_custom_call.1} parent=0
    #allocation2 [shape = 'u8[65536]{0}', space=vmem, size = 0x10000, scoped, tag = 'output window, operand 0, single buffered']
    #allocation3 [shape = 's32[1]{0}', space=sflag, size = 0x4, scoped, tag = 'scoped memory for tpu_custom_call.1']
    %8 = vsyncpa [#allocation3], 0
    // Predicated region
    $region2: #{tpu_custom_call.1} parent=1 // pred_check
      _
    $region3: #{tpu_custom_call.1} parent=1 // pred_check_branch
      %10 = sbr.rel (0) target = $region5
    $region4: #{tpu_custom_call.1} parent=1 // pred_region
      _
    $region5: #{tpu_custom_call.1} parent=1 // pred_fallthru
      _
    // Predicated region
    $region6: #{tpu_custom_call.1} parent=1 // pred_check
      _
    $region7: #{tpu_custom_call.1} parent=1 // pred_check_branch
      %12 = sbr.rel (0) target = $region9
    $region8: #{tpu_custom_call.1} parent=1 // pred_region
      _
    $region9: #{tpu_custom_call.1} parent=1 // pred_fallthru
      _
    // Predicated region
    $region10: #{tpu_custom_call.1} parent=1 // pred_check
      _
    $region11: #{tpu_custom_call.1} parent=1 // pred_check_branch
      %14 = sbr.rel (0) target = $region13
    $region12: #{tpu_custom_call.1} parent=1 // pred_region
      _
    $region13: #{tpu_custom_call.1} parent=1 // pred_fallthru
      _
    %v15 = vld [vmem:[%s0] sm:$0xff]
    %v16 = vld [vmem:[%s0 + $0x8] sm:$0xff]
    %v17 = vld [vmem:[%s0 + $0x10] sm:$0xff]
    %v18 = vld [vmem:[%s0 + $0x18] sm:$0xff]
    %v19 = vld [vmem:[%s0 + $0x20] sm:$0xff]
    %v20 = vld [vmem:[%s0 + $0x28] sm:$0xff]
    %v21 = vld [vmem:[%s0 + $0x30] sm:$0xff]
    %v22 = vld [vmem:[%s0 + $0x38] sm:$0xff]
    %v23 = vld [vmem:[%s0 + $0x40] sm:$0xff]
    %v24 = vld [vmem:[%s0 + $0x48] sm:$0xff]
    %v25 = vld [vmem:[%s0 + $0x50] sm:$0xff]
    %v26 = vld [vmem:[%s0 + $0x58] sm:$0xff]
    %v27 = vld [vmem:[%s0 + $0x60] sm:$0xff]
    %v28 = vld [vmem:[%s0 + $0x68] sm:$0xff]
    %v29 = vld [vmem:[%s0 + $0x70] sm:$0xff]
    %v30 = vld [vmem:[%s0 + $0x78] sm:$0xff]
    %v31 = vld [vmem:[%s1] sm:$0xff]
    %vm32 = vcmask 64512
    %v34 = vsel %vm32, %v15, 0
    %v37 = vsel %vm32, %v16, 0
    %v40 = vsel %vm32, %v17, 0
    %v43 = vsel %vm32, %v18, 0
    %v46 = vsel %vm32, %v19, 0
    %v49 = vsel %vm32, %v20, 0
    %v52 = vsel %vm32, %v21, 0
    %v55 = vsel %vm32, %v22, 0
    %v58 = vsel %vm32, %v23, 0
    %v61 = vsel %vm32, %v24, 0
    %v64 = vsel %vm32, %v25, 0
    %v67 = vsel %vm32, %v26, 0
    %v70 = vsel %vm32, %v27, 0
    %v73 = vsel %vm32, %v28, 0
    %v76 = vsel %vm32, %v29, 0
    %v79 = vsel %vm32, %v30, 0
    %81 = vmatprep.subr.mxu0 0.0
    %82 = vmatpush1.msra.mxu0 %v31
    %83 = vmatprep.subr.mxu0 0.0
    %84 = vmatpush1.msra.mxu0 0.0
    %85 = vmatprep.subr.mxu0 0.0
    %86 = vmatpush1.msra.mxu0 0.0
    %87 = vmatprep.subr.mxu0 0.0
    %88 = vmatpush1.msra.mxu0 0.0
    %89 = vmatprep.subr.mxu0 0.0
    %90 = vmatpush1.msra.mxu0 0.0
    %91 = vmatprep.subr.mxu0 0.0
    %92 = vmatpush1.msra.mxu0 0.0
    %93 = vmatprep.subr.mxu0 0.0
    %94 = vmatpush1.msra.mxu0 0.0
    %95 = vmatprep.subr.mxu0 0.0
    %96 = vmatpush1.msra.mxu0 0.0
    %97 = vmatprep.subr.mxu0 0.0
    %98 = vmatpush1.msra.mxu0 0.0
    %99 = vmatprep.subr.mxu0 0.0
    %100 = vmatpush1.msra.mxu0 0.0
    %101 = vmatprep.subr.mxu0 0.0
    %102 = vmatpush1.msra.mxu0 0.0
    %103 = vmatprep.subr.mxu0 0.0
    %104 = vmatpush1.msra.mxu0 0.0
    %105 = vmatprep.subr.mxu0 0.0
    %106 = vmatpush1.msra.mxu0 0.0
    %107 = vmatprep.subr.mxu0 0.0
    %108 = vmatpush1.msra.mxu0 0.0
    %109 = vmatprep.subr.mxu0 0.0
    %110 = vmatpush1.msra.mxu0 0.0
    %111 = vmatprep.subr.mxu0 0.0
    %112 = vmatpush1.msra.mxu0 0.0
    %113 = vmatprep.subr.mxu0 0.0
    %114 = vmatpush1.msra.mxu0 0.0
    %115 = vmatprep.subr.mxu0 0.0
    %116 = vmatpush1.msra.mxu0 0.0
    %117 = vmatprep.subr.mxu0 0.0
    %118 = vmatpush1.msra.mxu0 0.0
    %119 = vmatprep.subr.mxu0 0.0
    %120 = vmatpush1.msra.mxu0 0.0
    %121 = vmatprep.subr.mxu0 0.0
    %122 = vmatpush1.msra.mxu0 0.0
    %123 = vmatprep.subr.mxu0 0.0
    %124 = vmatpush1.msra.mxu0 0.0
    %125 = vmatprep.subr.mxu0 0.0
    %126 = vmatpush1.msra.mxu0 0.0
    %127 = vmatprep.subr.mxu0 0.0
    %128 = vmatpush1.msra.mxu0 0.0
    %129 = vmatprep.subr.mxu0 0.0
    %130 = vmatpush1.msra.mxu0 0.0
    %131 = vmatprep.subr.mxu0 0.0
    %132 = vmatpush1.msra.mxu0 0.0
    %133 = vmatprep.subr.mxu0 0.0
    %134 = vmatpush1.msra.mxu0 0.0
    %135 = vmatprep.subr.mxu0 0.0
    %136 = vmatpush1.msra.mxu0 0.0
    %137 = vmatprep.subr.mxu0 0.0
    %138 = vmatpush1.msra.mxu0 0.0
    %139 = vmatprep.subr.mxu0 0.0
    %140 = vmatpush1.msra.mxu0 0.0
    %141 = vmatprep.subr.mxu0 0.0
    %142 = vmatpush1.msra.mxu0 0.0
    %143 = vmatprep.subr.mxu0 0.0
    %144 = vmatpush1.msra.mxu0 0.0
    %145 = vmatprep.mubr.f32.mxu0 0.0
    %146 = vmatmul.mubr.f32.gmra.mrb[0].mxu0 %v34
    %v147 = vpop.f32.mrb[0].mxu0
    %v148 = vadd.f32 0.0, %v147
    %v149 = vpop.f32.mrb[0].mxu0
    %150 = vmatprep.mubr.f32.mxu0 0.0
    %151 = vmatmul.mubr.f32.gmra.mrb[0].mxu0 %v37
    %v152 = vpop.f32.mrb[0].mxu0
    %v153 = vadd.f32 0.0, %v152
    %v154 = vpop.f32.mrb[0].mxu0
    %155 = vmatprep.mubr.f32.mxu0 0.0
    %156 = vmatmul.mubr.f32.gmra.mrb[0].mxu0 %v40
    %v157 = vpop.f32.mrb[0].mxu0
    %v158 = vadd.f32 0.0, %v157
    %v159 = vpop.f32.mrb[0].mxu0
    %160 = vmatprep.mubr.f32.mxu0 0.0
    %161 = vmatmul.mubr.f32.gmra.mrb[0].mxu0 %v43
    %v162 = vpop.f32.mrb[0].mxu0
    %v163 = vadd.f32 0.0, %v162
    %v164 = vpop.f32.mrb[0].mxu0
    %165 = vmatprep.mubr.f32.mxu0 0.0
    %166 = vmatmul.mubr.f32.gmra.mrb[0].mxu0 %v46
    %v167 = vpop.f32.mrb[0].mxu0
    %v168 = vadd.f32 0.0, %v167
    %v169 = vpop.f32.mrb[0].mxu0
    %170 = vmatprep.mubr.f32.mxu0 0.0
    %171 = vmatmul.mubr.f32.gmra.mrb[0].mxu0 %v49
    %v172 = vpop.f32.mrb[0].mxu0
    %v173 = vadd.f32 0.0, %v172
    %v174 = vpop.f32.mrb[0].mxu0
    %175 = vmatprep.mubr.f32.mxu0 0.0
    %176 = vmatmul.mubr.f32.gmra.mrb[0].mxu0 %v52
    %v177 = vpop.f32.mrb[0].mxu0
    %v178 = vadd.f32 0.0, %v177
    %v179 = vpop.f32.mrb[0].mxu0
    %180 = vmatprep.mubr.f32.mxu0 0.0
    %181 = vmatmul.mubr.f32.gmra.mrb[0].mxu0 %v55
    %v182 = vpop.f32.mrb[0].mxu0
    %v183 = vadd.f32 0.0, %v182
    %v184 = vpop.f32.mrb[0].mxu0
    %185 = vmatprep.mubr.f32.mxu0 0.0
    %186 = vmatmul.mubr.f32.gmra.mrb[0].mxu0 %v58
    %v187 = vpop.f32.mrb[0].mxu0
    %v188 = vadd.f32 0.0, %v187
    %v189 = vpop.f32.mrb[0].mxu0
    %190 = vmatprep.mubr.f32.mxu0 0.0
    %191 = vmatmul.mubr.f32.gmra.mrb[0].mxu0 %v61
    %v192 = vpop.f32.mrb[0].mxu0
    %v193 = vadd.f32 0.0, %v192
    %v194 = vpop.f32.mrb[0].mxu0
    %195 = vmatprep.mubr.f32.mxu0 0.0
    %196 = vmatmul.mubr.f32.gmra.mrb[0].mxu0 %v64
    %v197 = vpop.f32.mrb[0].mxu0
    %v198 = vadd.f32 0.0, %v197
    %v199 = vpop.f32.mrb[0].mxu0
    %200 = vmatprep.mubr.f32.mxu0 0.0
    %201 = vmatmul.mubr.f32.gmra.mrb[0].mxu0 %v67
    %v202 = vpop.f32.mrb[0].mxu0
    %v203 = vadd.f32 0.0, %v202
    %v204 = vpop.f32.mrb[0].mxu0
    %205 = vmatprep.mubr.f32.mxu0 0.0
    %206 = vmatmul.mubr.f32.gmra.mrb[0].mxu0 %v70
    %v207 = vpop.f32.mrb[0].mxu0
    %v208 = vadd.f32 0.0, %v207
    %v209 = vpop.f32.mrb[0].mxu0
    %210 = vmatprep.mubr.f32.mxu0 0.0
    %211 = vmatmul.mubr.f32.gmra.mrb[0].mxu0 %v73
    %v212 = vpop.f32.mrb[0].mxu0
    %v213 = vadd.f32 0.0, %v212
    %v214 = vpop.f32.mrb[0].mxu0
    %215 = vmatprep.mubr.f32.mxu0 0.0
    %216 = vmatmul.mubr.f32.gmra.mrb[0].mxu0 %v76
    %v217 = vpop.f32.mrb[0].mxu0
    %v218 = vadd.f32 0.0, %v217
    %v219 = vpop.f32.mrb[0].mxu0
    %220 = vmatprep.mubr.f32.mxu0 0.0
    %221 = vmatmul.mubr.f32.gmra.mrb[0].mxu0 %v79
    %v222 = vpop.f32.mrb[0].mxu0
    %v223 = vadd.f32 0.0, %v222
    %v224 = vpop.f32.mrb[0].mxu0
    %225 = vdwg.mxu0
    %v226 = vld [vmem:[%s2] sm:$0xff]
    %v227 = vld [vmem:[%s2 + $0x8] sm:$0xff]
    %v228 = vld [vmem:[%s2 + $0x10] sm:$0xff]
    %v229 = vld [vmem:[%s2 + $0x18] sm:$0xff]
    %v230 = vld [vmem:[%s2 + $0x20] sm:$0xff]
    %v231 = vld [vmem:[%s2 + $0x28] sm:$0xff]
    %v232 = vld [vmem:[%s2 + $0x30] sm:$0xff]
    %v233 = vld [vmem:[%s2 + $0x38] sm:$0xff]
    %v234 = vld [vmem:[%s2 + $0x40] sm:$0xff]
    %v235 = vld [vmem:[%s2 + $0x48] sm:$0xff]
    %v236 = vld [vmem:[%s2 + $0x50] sm:$0xff]
    %v237 = vld [vmem:[%s2 + $0x58] sm:$0xff]
    %v238 = vld [vmem:[%s2 + $0x60] sm:$0xff]
    %v239 = vld [vmem:[%s2 + $0x68] sm:$0xff]
    %v240 = vld [vmem:[%s2 + $0x70] sm:$0xff]
    %v241 = vld [vmem:[%s2 + $0x78] sm:$0xff]
    %243 = vset.pattern.permute.xlu0 0
    %244 = vperm.xlu0 %243, %v226
    %v245 = vpop.permute.xlu0 %244
    %248 = vset.pattern.permute.xlu0 0
    %249 = vperm.xlu0 %248, %v227
    %v250 = vpop.permute.xlu0 %249
    %253 = vset.pattern.permute.xlu0 0
    %254 = vperm.xlu0 %253, %v228
    %v255 = vpop.permute.xlu0 %254
    %258 = vset.pattern.permute.xlu0 0
    %259 = vperm.xlu0 %258, %v229
    %v260 = vpop.permute.xlu0 %259
    %263 = vset.pattern.permute.xlu0 0
    %264 = vperm.xlu0 %263, %v230
    %v265 = vpop.permute.xlu0 %264
    %268 = vset.pattern.permute.xlu0 0
    %269 = vperm.xlu0 %268, %v231
    %v270 = vpop.permute.xlu0 %269
    %273 = vset.pattern.permute.xlu0 0
    %274 = vperm.xlu0 %273, %v232
    %v275 = vpop.permute.xlu0 %274
    %278 = vset.pattern.permute.xlu0 0
    %279 = vperm.xlu0 %278, %v233
    %v280 = vpop.permute.xlu0 %279
    %283 = vset.pattern.permute.xlu0 0
    %284 = vperm.xlu0 %283, %v234
    %v285 = vpop.permute.xlu0 %284
    %288 = vset.pattern.permute.xlu0 0
    %289 = vperm.xlu0 %288, %v235
    %v290 = vpop.permute.xlu0 %289
    %293 = vset.pattern.permute.xlu0 0
    %294 = vperm.xlu0 %293, %v236
    %v295 = vpop.permute.xlu0 %294
    %298 = vset.pattern.permute.xlu0 0
    %299 = vperm.xlu0 %298, %v237
    %v300 = vpop.permute.xlu0 %299
    %303 = vset.pattern.permute.xlu0 0
    %304 = vperm.xlu0 %303, %v238
    %v305 = vpop.permute.xlu0 %304
    %308 = vset.pattern.permute.xlu0 0
    %309 = vperm.xlu0 %308, %v239
    %v310 = vpop.permute.xlu0 %309
    %313 = vset.pattern.permute.xlu0 0
    %314 = vperm.xlu0 %313, %v240
    %v315 = vpop.permute.xlu0 %314
    %318 = vset.pattern.permute.xlu0 0
    %319 = vperm.xlu0 %318, %v241
    %v320 = vpop.permute.xlu0 %319
    %v322 = vmul.f32 %v148, %v245
    %v323 = vmul.f32 %v153, %v250
    %v324 = vmul.f32 %v158, %v255
    %v325 = vmul.f32 %v163, %v260
    %v326 = vmul.f32 %v168, %v265
    %v327 = vmul.f32 %v173, %v270
    %v328 = vmul.f32 %v178, %v275
    %v329 = vmul.f32 %v183, %v280
    %v330 = vmul.f32 %v188, %v285
    %v331 = vmul.f32 %v193, %v290
    %v332 = vmul.f32 %v198, %v295
    %v333 = vmul.f32 %v203, %v300
    %v334 = vmul.f32 %v208, %v305
    %v335 = vmul.f32 %v213, %v310
    %v336 = vmul.f32 %v218, %v315
    %v337 = vmul.f32 %v223, %v320
    %338 = vst [vmem:[#allocation2] sm:$0xff] %v322
    %339 = vst [vmem:[#allocation2 + $0x8] sm:$0xff] %v323
    %340 = vst [vmem:[#allocation2 + $0x10] sm:$0xff] %v324
    %341 = vst [vmem:[#allocation2 + $0x18] sm:$0xff] %v325
    %342 = vst [vmem:[#allocation2 + $0x20] sm:$0xff] %v326
    %343 = vst [vmem:[#allocation2 + $0x28] sm:$0xff] %v327
    %344 = vst [vmem:[#allocation2 + $0x30] sm:$0xff] %v328
    %345 = vst [vmem:[#allocation2 + $0x38] sm:$0xff] %v329
    %346 = vst [vmem:[#allocation2 + $0x40] sm:$0xff] %v330
    %347 = vst [vmem:[#allocation2 + $0x48] sm:$0xff] %v331
    %348 = vst [vmem:[#allocation2 + $0x50] sm:$0xff] %v332
    %349 = vst [vmem:[#allocation2 + $0x58] sm:$0xff] %v333
    %350 = vst [vmem:[#allocation2 + $0x60] sm:$0xff] %v334
    %351 = vst [vmem:[#allocation2 + $0x68] sm:$0xff] %v335
    %352 = vst [vmem:[#allocation2 + $0x70] sm:$0xff] %v336
    %353 = vst [vmem:[#allocation2 + $0x78] sm:$0xff] %v337
    // Predicated region
    $region14: #{tpu_custom_call.1} parent=1 // pred_check
      _
    $region15: #{tpu_custom_call.1} parent=1 // pred_check_branch
      %355 = sbr.rel (0) target = $region17
    $region16: #{tpu_custom_call.1} parent=1 // pred_region
      %s357 = ssub.s32 2048, 2048
      %358 = vsyncadd [#allocation3], %s357
      %s359 = sshll.u32 [#allocation2], 4
      %s360 = int_to_ptr.vmem [resolvable:$true] %s359
      %365 = dma.vmem_to_hbm [thread:$0]  %s360, 2048, %s3, [#allocation3], 128, 128, 8
    $region17: #{tpu_custom_call.1} parent=1 // pred_fallthru
      _
    // Predicated region
    $region18: #{tpu_custom_call.1} parent=1 // pred_check
      _
    $region19: #{tpu_custom_call.1} parent=1 // pred_check_branch
      %367 = sbr.rel (0) target = $region21
    $region20: #{tpu_custom_call.1} parent=1 // pred_region
      %368 = dma.done [#allocation3], 2048
    $region21: #{tpu_custom_call.1} parent=1 // pred_fallthru
      _
    %369 = vsyncpa [#allocation3], 1

</llo_original>
